<compile_context>
chip_gen: v6e
topology: v6e:2x2x1
jax: 0.10.0
libtpu: 0.0.40
codegen_flags: <defaults>
</compile_context>

<pallas_src>
import math
import functools

import jax
import jax.numpy as jnp
from jax.experimental import pallas as pl
from jax.experimental.pallas import tpu as pltpu


def _pick_tile(dim, preferred):
    """Largest of {preferred, preferred//2, 128} dividing dim, else dim itself
    (small / awkward dims become a single full-extent block)."""
    for t in (preferred, preferred // 2, 128):
        if t <= dim and dim % t == 0:
            return t
    return dim


# ----------------------------------------------------------------------------
# QKV projection straight into slab layout:  slabs[b, n, l] = W[n,:] . x[b,l,:]
# ----------------------------------------------------------------------------
def _proj_slab_kernel(x_ref, w_ref, b_ref, o_ref, acc_ref):
    # acc[n, i] += sum_e w[n, e] * x[i, e]   ("NT" matmul, torch weight layout)
    @pl.when(pl.program_id(2) == 0)
    def _init():
        acc_ref[...] = jnp.zeros_like(acc_ref)

    acc_ref[...] += jax.lax.dot_general(
        w_ref[...], x_ref[0], (((1,), (1,)), ((), ())),
        preferred_element_type=jnp.float32)

    @pl.when(pl.program_id(2) == pl.num_programs(2) - 1)
    def _finalize():
        o_ref[0] = (acc_ref[...] + b_ref[...].astype(jnp.float32)
                    ).astype(o_ref.dtype)


def project_to_slabs(x, w, b_col, *, tl=256, tk=512):
    """x: (B, L, E); w: (N, E) torch layout; b_col: (N, 1).
    Returns slabs (B, N, L) with the sequence axis lane-dense (feeds the
    attention kernel directly, no wrapper transpose).  For very large N the
    full-N weight column block would additionally be tiled; at typical
    embed dims it fits VMEM comfortably."""
    B, L, E = x.shape
    N = w.shape[0]
    tl = _pick_tile(L, tl)
    tk = _pick_tile(E, tk)
    return pl.pallas_call(
        _proj_slab_kernel,
        out_shape=jax.ShapeDtypeStruct((B, N, L), x.dtype),
        grid_spec=pltpu.PrefetchScalarGridSpec(
            num_scalar_prefetch=0,
            grid=(B, L // tl, E // tk),
            in_specs=[
                pl.BlockSpec((1, tl, tk), lambda b, li, ki: (b, li, ki)),
                pl.BlockSpec((N, tk), lambda b, li, ki: (0, ki)),
                pl.BlockSpec((N, 1), lambda b, li, ki: (0, 0)),
            ],
            out_specs=pl.BlockSpec((1, N, tl), lambda b, li, ki: (b, 0, li)),
            scratch_shapes=[pltpu.VMEM((N, tl), jnp.float32)],
        ),
        compiler_params=pltpu.CompilerParams(
            dimension_semantics=("parallel", "parallel", "arbitrary")),
    )(x, w, b_col)


# ----------------------------------------------------------------------------
# GQA flash attention on lane-dense (head_dim, L) slabs, whole-L KV residency,
# in-kernel KV loop with loop-carried running statistics.
# ----------------------------------------------------------------------------
def _attn_kernel(q_ref, k_ref, v_ref, o_ref, *, scale, kv_tile):
    hd = q_ref.shape[1]
    tq = q_ref.shape[2]
    lk = k_ref.shape[2]
    num_kv = lk // kv_tile

    # Softmax scale folded into Q once per grid step (not per KV tile).
    q = (q_ref[0] * scale).astype(q_ref.dtype)                 # (hd, tq)
    # Ones operand for computing the softmax denominator on the MXU.
    ones8 = jnp.ones((8, kv_tile), dtype=v_ref.dtype)

    def body(i, carry):
        m_prev, l_prev, acc_prev = carry
        ks = pl.multiple_of(i * kv_tile, kv_tile)
        k_t = k_ref[0, :, pl.ds(ks, kv_tile)]                  # (hd, tk)
        v_t = v_ref[0, :, pl.ds(ks, kv_tile)]                  # (hd, tk)

        # s[j, i] = sum_d k[d, j] * q[d, i]  -> (tk, tq); everything below is
        # lane-dense (queries on the 128-lane axis).
        s = jax.lax.dot_general(k_t, q, (((0,), (0,)), ((), ())),
                                preferred_element_type=jnp.float32)
        m_new = jnp.maximum(m_prev, jnp.max(s, axis=0, keepdims=True))
        alpha = jnp.exp(m_prev - m_new)                        # (1, tq)
        p = jnp.exp(s - m_new)                                 # (tk, tq) f32
        p_v = p.astype(v_ref.dtype)

        # pv[d, i] = sum_j v[d, j] * p[j, i]
        pv = jax.lax.dot_general(v_t, p_v, (((1,), (0,)), ((), ())),
                                 preferred_element_type=jnp.float32)
        # Denominator via the MXU (ones-row matmul) instead of a cross-sublane
        # VPU/XLU reduction of p; the MXU has large slack here.
        l_inc = jax.lax.dot_general(ones8, p_v, (((1,), (0,)), ((), ())),
                                    preferred_element_type=jnp.float32)[0:1]

        return (m_new,
                alpha * l_prev + l_inc,
                alpha * acc_prev + pv)

    m0 = jnp.full((1, tq), -jnp.inf, dtype=jnp.float32)
    l0 = jnp.zeros((1, tq), dtype=jnp.float32)
    acc0 = jnp.zeros((hd, tq), dtype=jnp.float32)
    _, l, acc = jax.lax.fori_loop(0, num_kv, body, (m0, l0, acc0))

    inv = pl.reciprocal(l, approx=True)                        # EUP slot, ~free
    o_ref[0] = (acc * inv).astype(o_ref.dtype)


def gqa_attention(q_slabs, k_slabs, v_slabs, num_heads, num_kv_heads, head_dim,
                  *, head_offsets=(0, 0, 0), tq=256, kv_tile=256):
    """q_slabs: (B, >=H*hd, Lq); k/v_slabs: (B, >=Hkv*hd, Lk).
    head_offsets = starting head index (units of hd rows) of the q/k/v
    sections inside their slab arrays, so the fused (B, (H+2Hkv)*hd, L) QKV
    slab can be passed for all three operands without any split/copy.
    Returns attention-output slabs (B, H*hd, Lq)."""
    B = q_slabs.shape[0]
    Lq = q_slabs.shape[2]
    Lk = k_slabs.shape[2]
    H, Hkv, hd = num_heads, num_kv_heads, head_dim
    G = H // Hkv
    qo, ko, vo = head_offsets
    scale = 1.0 / math.sqrt(hd)
    tq = _pick_tile(Lq, tq)
    kv_tile = _pick_tile(Lk, kv_tile)
    # VMEM budget note (v7x, 64 MiB physical): whole-L KV residency costs
    # ~2 (K,V) * 2 (double buffer) * hd * Lk * itemsize per grid step; for very
    # long Lk fall back to tiled KV blocks / raise vmem_limit_bytes.

    kernel = functools.partial(_attn_kernel, scale=scale, kv_tile=kv_tile)
    return pl.pallas_call(
        kernel,
        out_shape=jax.ShapeDtypeStruct((B, H * hd, Lq), q_slabs.dtype),
        grid_spec=pltpu.PrefetchScalarGridSpec(
            num_scalar_prefetch=0,
            grid=(B * H, Lq // tq),
            in_specs=[
                pl.BlockSpec((1, hd, tq),
                             lambda bh, qi: (bh // H, qo + (bh % H), qi)),
                # Whole-L K/V residency.  The block index depends only on bh
                # and is identical for consecutive query heads of a group, so
                # the pipeline skips the re-DMA: each KV slab is fetched once
                # per (batch, kv head) -- repeat_interleave done by indexing.
                pl.BlockSpec((1, hd, Lk),
                             lambda bh, qi: (bh // H, ko + (bh % H) // G, 0)),
                pl.BlockSpec((1, hd, Lk),
                             lambda bh, qi: (bh // H, vo + (bh % H) // G, 0)),
            ],
            out_specs=pl.BlockSpec((1, hd, tq),
                                   lambda bh, qi: (bh // H, bh % H, qi)),
        ),
        compiler_params=pltpu.CompilerParams(
            dimension_semantics=("parallel", "parallel")),
    )(q_slabs, k_slabs, v_slabs)


# ----------------------------------------------------------------------------
# Output projection consuming attention slabs directly:
#   out[b, l, n] = sum_d attn[b, d, l] * wo_t[d, n] + bo[n]
# (the slab -> token-major transpose is folded into the dot's dim numbers)
# ----------------------------------------------------------------------------
def _out_proj_kernel(a_ref, w_ref, b_ref, o_ref, acc_ref):
    @pl.when(pl.program_id(3) == 0)
    def _init():
        acc_ref[...] = jnp.zeros_like(acc_ref)

    acc_ref[...] += jax.lax.dot_general(
        a_ref[0], w_ref[...], (((0,), (0,)), ((), ())),
        preferred_element_type=jnp.float32)

    @pl.when(pl.program_id(3) == pl.num_programs(3) - 1)
    def _finalize():
        o_ref[0] = (acc_ref[...] + b_ref[...].astype(jnp.float32)
                    ).astype(o_ref.dtype)


def out_projection(attn_slabs, w_t, b_row, *, tl=256, tn=256, tk=256):
    """attn_slabs: (B, E_in, L); w_t: (E_in, E_out) pre-transposed at init;
    b_row: (1, E_out).  Returns (B, L, E_out)."""
    B, E_in, L = attn_slabs.shape
    E_out = w_t.shape[1]
    tl = _pick_tile(L, tl)
    tn = _pick_tile(E_out, tn)
    tk = _pick_tile(E_in, tk)
    return pl.pallas_call(
        _out_proj_kernel,
        out_shape=jax.ShapeDtypeStruct((B, L, E_out), attn_slabs.dtype),
        grid_spec=pltpu.PrefetchScalarGridSpec(
            num_scalar_prefetch=0,
            grid=(B, L // tl, E_out // tn, E_in // tk),
            in_specs=[
                pl.BlockSpec((1, tk, tl), lambda b, li, ni, ki: (b, ki, li)),
                pl.BlockSpec((tk, tn), lambda b, li, ni, ki: (ki, ni)),
                pl.BlockSpec((1, tn), lambda b, li, ni, ki: (0, ni)),
            ],
            out_specs=pl.BlockSpec((1, tl, tn),
                                   lambda b, li, ni, ki: (b, li, ni)),
            scratch_shapes=[pltpu.VMEM((tl, tn), jnp.float32)],
        ),
        compiler_params=pltpu.CompilerParams(
            dimension_semantics=("parallel", "parallel", "parallel",
                                 "arbitrary")),
    )(attn_slabs, w_t, b_row)


# ----------------------------------------------------------------------------
# Parameters (nn.Linear-style init) and one-time weight preprocessing
# ----------------------------------------------------------------------------
def init_raw_params(key, embed_dim, num_heads, num_kv_heads):
    """Mirrors nn.Linear default init: uniform(+-1/sqrt(fan_in))."""
    hd = embed_dim // num_heads
    kv_dim = num_kv_heads * hd
    ks = jax.random.split(key, 8)
    bound = 1.0 / math.sqrt(embed_dim)

    def u(k, shape):
        return jax.random.uniform(k, shape, jnp.float32, -bound, bound)

    return {
        "wq": u(ks[0], (embed_dim, embed_dim)), "bq": u(ks[1], (embed_dim,)),
        "wk": u(ks[2], (kv_dim, embed_dim)),    "bk": u(ks[3], (kv_dim,)),
        "wv": u(ks[4], (kv_dim, embed_dim)),    "bv": u(ks[5], (kv_dim,)),
        "wo": u(ks[6], (embed_dim, embed_dim)), "bo": u(ks[7], (embed_dim,)),
    }


def prepare_params(raw):
    """One-time weight preprocessing, hoisted out of the forward path:
    QKV fusion (single HBM read of x), bias reshapes, Wo pre-transpose."""
    w_qkv = jnp.concatenate([raw["wq"], raw["wk"], raw["wv"]], axis=0)
    b_qkv = jnp.concatenate([raw["bq"], raw["bk"], raw["bv"]], axis=0)[:, None]
    return {
        "w_qkv": w_qkv, "b_qkv": b_qkv,                # fused self-attention path
        "wq": raw["wq"], "bq": raw["bq"][:, None],     # separate (cross-attn) path
        "wk": raw["wk"], "bk": raw["bk"][:, None],
        "wv": raw["wv"], "bv": raw["bv"][:, None],
        "wo_t": jnp.asarray(raw["wo"].T), "bo": raw["bo"][None, :],
    }


# ----------------------------------------------------------------------------
# Module forward (Pallas path)
# ----------------------------------------------------------------------------
def gqa_forward(prepared, Q, K, V, num_heads, num_kv_heads):
    B, L, E = Q.shape
    hd = E // num_heads
    assert hd % 8 == 0, "head_dim must be a multiple of 8 (sublane tile)"
    H, Hkv = num_heads, num_kv_heads

    if Q is K and K is V:
        # Fused QKV projection straight into slab layout (B, (H+2Hkv)*hd, L);
        # attention indexes q/k/v sections via head offsets -> no split/copy.
        slabs = project_to_slabs(Q, prepared["w_qkv"], prepared["b_qkv"])
        attn = gqa_attention(slabs, slabs, slabs, H, Hkv, hd,
                             head_offsets=(0, H, H + Hkv))
    else:
        q_slabs = project_to_slabs(Q, prepared["wq"], prepared["bq"])
        k_slabs = project_to_slabs(K, prepared["wk"], prepared["bk"])
        v_slabs = project_to_slabs(V, prepared["wv"], prepared["bv"])
        attn = gqa_attention(q_slabs, k_slabs, v_slabs, H, Hkv, hd,
                             head_offsets=(0, 0, 0))

    # (B, E, L) slabs -> (B, L, E); attn_drop / proj_drop are identity (p=0.0).
    return out_projection(attn, prepared["wo_t"], prepared["bo"])


# ----------------------------------------------------------------------------
# Pure-JAX reference mirroring the PyTorch forward (rpe=None branch)
# ----------------------------------------------------------------------------
def reference_forward(raw, Q, K, V, num_heads, num_kv_heads):
    B, L, E = Q.shape
    hd = E // num_heads
    q = Q @ raw["wq"].T + raw["bq"]
    k = K @ raw["wk"].T + raw["bk"]
    v = V @ raw["wv"].T + raw["bv"]
    q = q.reshape(B, L, num_heads, hd).transpose(0, 2, 1, 3)
    k = k.reshape(B, L, num_kv_heads, hd).transpose(0, 2, 1, 3)
    v = v.reshape(B, L, num_kv_heads, hd).transpose(0, 2, 1, 3)
    g = num_heads // num_kv_heads
    k = jnp.repeat(k, g, axis=1)          # repeat_interleave on the head axis
    v = jnp.repeat(v, g, axis=1)
    attn = (q @ jnp.swapaxes(k, -1, -2)) / math.sqrt(hd)
    attn = jax.nn.softmax(attn, axis=-1)
    qv = (attn @ v).transpose(0, 2, 1, 3).reshape(B, L, E)
    return qv @ raw["wo"].T + raw["bo"]


if __name__ == "__main__":
    B, L, E = 2, 256, 64
    num_heads = 4
    num_kv_heads = num_heads // 2   # the module hard-codes this ratio

    key = jax.random.PRNGKey(0)
    kx, kp = jax.random.split(key)
    x = jax.random.normal(kx, (B, L, E), dtype=jnp.float32)

    raw = init_raw_params(kp, E, num_heads, num_kv_heads)
    prepared = prepare_params(raw)        # one-time weight prep (not per call)

    out = jax.block_until_ready(
        gqa_forward(prepared, x, x, x, num_heads, num_kv_heads))
    ref = reference_forward(raw, x, x, x, num_heads, num_kv_heads)

    assert out.shape == (B, L, E), out.shape
    err = float(jnp.max(jnp.abs(out - ref)))
    assert err < 2e-3, f"max abs err {err}"
    print("KERNEL_OK")
</pallas_src>

<mosaic_0001>
module attributes {stable_mosaic.version = 11 : i64} {
  func.func @_proj_slab_kernel(%arg0: i32, %arg1: i32, %arg2: i32, %arg3: memref<1x256x64xf32, #tpu.memory_space<vmem>>, %arg4: memref<128x64xf32, #tpu.memory_space<vmem>>, %arg5: memref<128x1xf32, #tpu.memory_space<vmem>>, %arg6: memref<1x128x256xf32, #tpu.memory_space<vmem>>, %arg7: memref<128x256xf32, #tpu.memory_space<vmem>>) attributes {dimension_semantics = [#tpu.dimension_semantics<parallel>, #tpu.dimension_semantics<parallel>, #tpu.dimension_semantics<arbitrary>], iteration_bounds = array<i64: 2, 1, 1>, scalar_prefetch = 0 : i64, scratch_operands = 1 : i64, tpu.core_type = #tpu.core_type<tc>, window_params = [{transform_indices = @transform_0, window_bounds = array<i64: 1, 256, 64>}, {transform_indices = @transform_1, window_bounds = array<i64: 128, 64>}, {pipeline_mode = #tpu.pipeline_mode<synchronous>, transform_indices = @transform_2, window_bounds = array<i64: 128, 1>}, {transform_indices = @transform_3, window_bounds = array<i64: 1, 128, 256>}]} {
    %c0_i32 = arith.constant 0 : i32
    %0 = arith.cmpi eq, %arg2, %c0_i32 : i32
    %1 = arith.extui %0 : i1 to i32
    %c0_i32_0 = arith.constant 0 : i32
    %2 = arith.cmpi ne, %1, %c0_i32_0 : i32
    scf.if %2 {
      %cst_11 = arith.constant 0.000000e+00 : f32
      %13 = vector.broadcast %cst_11 : f32 to vector<128x256xf32>
      %c0_12 = arith.constant 0 : index
      %c0_13 = arith.constant 0 : index
      %14 = vector.load %arg7[%c0_12, %c0_13] : memref<128x256xf32, #tpu.memory_space<vmem>>, vector<128x256xf32>
      tpu.vector_store %arg7[%c0_12, %c0_13], %13 {strides = array<i32>} : memref<128x256xf32, #tpu.memory_space<vmem>>, vector<128x256xf32>,
    } else {
    }
    %c0 = arith.constant 0 : index
    %c0_1 = arith.constant 0 : index
    %3 = vector.load %arg7[%c0, %c0_1] : memref<128x256xf32, #tpu.memory_space<vmem>>, vector<128x256xf32>
    %c0_2 = arith.constant 0 : index
    %c0_3 = arith.constant 0 : index
    %4 = vector.load %arg4[%c0_2, %c0_3] : memref<128x64xf32, #tpu.memory_space<vmem>>, vector<128x64xf32>
    %c0_4 = arith.constant 0 : index
    %c0_5 = arith.constant 0 : index
    %c0_6 = arith.constant 0 : index
    %5 = vector.load %arg3[%c0_4, %c0_5, %c0_6] : memref<1x256x64xf32, #tpu.memory_space<vmem>>, vector<1x256x64xf32>
    %6 = vector.shape_cast %5 : vector<1x256x64xf32> to vector<256x64xf32>
    %cst = arith.constant dense<0.000000e+00> : vector<128x256xf32>
    %7 = tpu.matmul %4, %6, %cst {dimension_numbers = #tpu.dot_dimension_numbers<[1], [1], [0], [0], [0, 0, 1, 0], [], []>} : vector<128x64xf32>, vector<256x64xf32>, vector<128x256xf32> -> vector<128x256xf32>
    %8 = arith.addf %3, %7 : vector<128x256xf32>
    %c0_7 = arith.constant 0 : index
    %c0_8 = arith.constant 0 : index
    %9 = vector.load %arg7[%c0_7, %c0_8] : memref<128x256xf32, #tpu.memory_space<vmem>>, vector<128x256xf32>
    tpu.vector_store %arg7[%c0_7, %c0_8], %8 {strides = array<i32>} : memref<128x256xf32, #tpu.memory_space<vmem>>, vector<128x256xf32>,
    %c0_i32_9 = arith.constant 0 : i32
    %10 = arith.cmpi eq, %arg2, %c0_i32_9 : i32
    %11 = arith.extui %10 : i1 to i32
    %c0_i32_10 = arith.constant 0 : i32
    %12 = arith.cmpi ne, %11, %c0_i32_10 : i32
    scf.if %12 {
      %c0_11 = arith.constant 0 : index
      %c0_12 = arith.constant 0 : index
      %13 = vector.load %arg7[%c0_11, %c0_12] : memref<128x256xf32, #tpu.memory_space<vmem>>, vector<128x256xf32>
      %c0_13 = arith.constant 0 : index
      %c0_14 = arith.constant 0 : index
      %14 = vector.load %arg5[%c0_13, %c0_14] : memref<128x1xf32, #tpu.memory_space<vmem>>, vector<128x1xf32>
      %15 = vector.broadcast %14 : vector<128x1xf32> to vector<128x256xf32>
      %16 = arith.addf %13, %15 : vector<128x256xf32>
      %c0_15 = arith.constant 0 : index
      %c0_16 = arith.constant 0 : index
      %c0_17 = arith.constant 0 : index
      %17 = vector.load %arg6[%c0_15, %c0_16, %c0_17] : memref<1x128x256xf32, #tpu.memory_space<vmem>>, vector<1x128x256xf32>
      %18 = vector.shape_cast %17 : vector<1x128x256xf32> to vector<128x256xf32>
      %19 = vector.shape_cast %16 : vector<128x256xf32> to vector<1x128x256xf32>
      tpu.vector_store %arg6[%c0_15, %c0_16, %c0_17], %19 {strides = array<i32>} : memref<1x128x256xf32, #tpu.memory_space<vmem>>, vector<1x128x256xf32>,
    } else {
    }
    return
  }
  func.func @transform_0(%arg0: i32, %arg1: i32, %arg2: i32) -> (i32, i32, i32) {
    %c0_i32 = arith.constant 0 : i32
    return %arg0, %arg1, %arg2 : i32, i32, i32
  }
  func.func @transform_1(%arg0: i32, %arg1: i32, %arg2: i32) -> (i32, i32) {
    %c0_i32 = arith.constant 0 : i32
    %c0_i32_0 = arith.constant 0 : i32
    return %c0_i32, %arg2 : i32, i32
  }
  func.func @transform_2(%arg0: i32, %arg1: i32, %arg2: i32) -> (i32, i32) {
    %c0_i32 = arith.constant 0 : i32
    %c0_i32_0 = arith.constant 0 : i32
    %c0_i32_1 = arith.constant 0 : i32
    return %c0_i32, %c0_i32_0 : i32, i32
  }
  func.func @transform_3(%arg0: i32, %arg1: i32, %arg2: i32) -> (i32, i32, i32) {
    %c0_i32 = arith.constant 0 : i32
    %c0_i32_0 = arith.constant 0 : i32
    return %arg0, %c0_i32, %arg1 : i32, i32, i32
  }
}

</mosaic_0001>

<llo_original>
// kernel: tpu_custom_call.1
$region0: #{tpu_custom_call.1}
  #allocation0 [shape = 'u32[]', space=smem, size = 0x4, offset = 0x4, fixed_abs, tag = 'smem constant byte address 0x4 - core index']
  #allocation1 [shape = 'u32[144,128]{1,0:T(1,128)}', space=vmem, size = 0x12000, scoped, tag = 'internal scratch']
  #allocation2 [shape = 'f32[128,256]{1,0:T(8,128)}', space=vmem, size = 0x20000, scoped, tag = 'scratch operand']
  %s0 = inlined_call_operand.vmem [shape: f32[2,256,64], index: 0, kind: input, shape index: {}]
  %s1 = inlined_call_operand.vmem [shape: f32[128,64], index: 1, kind: input, shape index: {}]
  %s2 = inlined_call_operand.vmem [shape: f32[128,1], index: 2, kind: input, shape index: {}]
  %s3 = inlined_call_operand.hbm [shape: f32[2,128,256], index: 3, kind: output, shape index: {}]
  %s4 = sld [smem:[#allocation0]]
  $region53: #{tpu_custom_call.1} parent=0
    _
  %s6 = ssub.s32 1, %s4
  %s7 = scalar_select 0, %s6, %s4
  $region1: #{tpu_custom_call.1} parent=0
    #allocation3 [shape = 'u8[262144]{0}', space=vmem, size = 0x40000, scoped, tag = 'output window, operand 0']
    #allocation4 [shape = 's32[2]{0}', space=sflag, size = 0x8, scoped, tag = 'scoped memory for tpu_custom_call.1']
    %8 = vsyncpa [#allocation4], 0
    %s9 = scalar_lea.sflag [#allocation4], 1
    %10 = vsyncpa %s9, 0
    loop: start=0, step=1, limit=4
    $region2: #{tpu_custom_call.1} parent=1 // loop_pre_header
      _
    $region3: #{tpu_custom_call.1} parent=1 // loop_header
      %s12 = sphi 0, %s16
      %p13 = scmp.ge.s32.totalorder %s12, 4
      %s19 = sphi 0, %s38
      %s20 = sphi 0, %s34
      %s21 = sphi 0, %s30
      %s22 = sphi 0, %s19
      %s23 = sphi 0, %s20
      %s24 = sphi 0, %s21
      %s25 = sphi 0, %s22
      %s26 = sphi 0, %s23
      %s27 = sphi 0, %s24
      %s45 = sphi 0, %s47
      %s48 = sphi 0, %s45
      %s49 = sphi 0, %s48
      %s65 = sphi 0, %s49
      %s71 = sphi 0, %s73
      %s74 = sphi 0, %s71
      %s75 = sphi 0, %s74
      %s91 = sphi 0, %s75
      %s95 = sphi 0, %s95
      %s97 = sphi 0, %s95
      %s98 = sphi 0, %s97
      %s112 = sphi 0, %s98
      %s120 = sphi 0, %s122
      %s123 = sphi 0, %s120
      %s124 = sphi 0, %s123
      %s140 = sphi 0, %s124
    $region4: #{tpu_custom_call.1} parent=1 // loop_header_branch
      %15 = sbr.rel (%p13) target = $region8
    $region5: #{tpu_custom_call.1} parent=1 // loop_body
      %s17 = ssub.s32 %s12, 1
      %s18 = ssub.s32 %s12, 2
      %s28 = sadd.s32 1, %s21
      %p29 = scmp.ge.s32.totalorder %s28, 1
      %s30 = scalar_select %p29, 0, %s28
      %s31 = sadd.s32 1, %s20
      %s32 = scalar_select %p29, %s31, %s20
      %p33 = scmp.ge.s32.totalorder %s32, 1
      %s34 = scalar_select %p33, 0, %s32
      %s35 = sadd.s32 1, %s19
      %s36 = scalar_select %p33, %s35, %s19
      %p37 = scmp.ge.s32.totalorder %s36, 2
      %s38 = scalar_select %p37, 0, %s36
      %s39 = ssub.s32 %s19, %s38
      %s40 = ssub.s32 %s20, %s34
      %s41 = sor.u32 %s39, %s40
      %s42 = ssub.s32 %s21, %s30
      %s43 = sor.u32 %s41, %s42
      %p44 = scmp.eq.s32.totalorder %s43, 0
      %s46 = sadd.s32 %s45, 1
      %s47 = scalar_select %p44, %s45, %s46
      %p50 = pneg %p44
      %p51 = scmp.eq.s32.totalorder %s12, 1
      %p52 = por %p50, %p51
      %p53 = scmp.ne.s32.totalorder %s45, %s48
      %p54 = scmp.eq.s32.totalorder %s12, 0
      %p55 = por %p53, %p54
      %p56 = scmp.ne.s32.totalorder %s45, %s48
      %p57 = scmp.eq.s32.totalorder %s17, 1
      %p58 = por %p56, %p57
      %p59 = scmp.ne.s32.totalorder %s48, %s49
      %p60 = scmp.eq.s32.totalorder %s17, 0
      %p61 = por %p59, %p60
      %p62 = scmp.ne.s32.totalorder %s48, %s49
      %p63 = scmp.eq.s32.totalorder %s18, 1
      %p64 = por %p62, %p63
      %p66 = scmp.ne.s32.totalorder %s49, %s65
      %p67 = scmp.eq.s32.totalorder %s18, 0
      %p68 = por %p66, %p67
      %s69 = ssub.s32 %s21, %s30
      %p70 = scmp.eq.s32.totalorder %s69, 0
      %s72 = sadd.s32 %s71, 1
      %s73 = scalar_select %p70, %s71, %s72
      %p76 = pneg %p70
      %p77 = scmp.eq.s32.totalorder %s12, 1
      %p78 = por %p76, %p77
      %p79 = scmp.ne.s32.totalorder %s71, %s74
      %p80 = scmp.eq.s32.totalorder %s12, 0
      %p81 = por %p79, %p80
      %p82 = scmp.ne.s32.totalorder %s71, %s74
      %p83 = scmp.eq.s32.totalorder %s17, 1
      %p84 = por %p82, %p83
      %p85 = scmp.ne.s32.totalorder %s74, %s75
      %p86 = scmp.eq.s32.totalorder %s17, 0
      %p87 = por %p85, %p86
      %p88 = scmp.ne.s32.totalorder %s74, %s75
      %p89 = scmp.eq.s32.totalorder %s18, 1
      %p90 = por %p88, %p89
      %p92 = scmp.ne.s32.totalorder %s75, %s91
      %p93 = scmp.eq.s32.totalorder %s18, 0
      %p94 = por %p92, %p93
      %s96 = sadd.s32 %s95, 1
      %p99 = scmp.eq.s32.totalorder %s12, 1
      %p100 = scmp.ne.s32.totalorder %s95, %s97
      %p101 = scmp.eq.s32.totalorder %s12, 0
      %p102 = por %p100, %p101
      %p103 = scmp.ne.s32.totalorder %s95, %s97
      %p104 = scmp.eq.s32.totalorder %s17, 1
      %p105 = por %p103, %p104
      %p106 = scmp.ne.s32.totalorder %s97, %s98
      %p107 = scmp.eq.s32.totalorder %s17, 0
      %p108 = por %p106, %p107
      %p109 = scmp.ne.s32.totalorder %s97, %s98
      %p110 = scmp.eq.s32.totalorder %s18, 1
      %p111 = por %p109, %p110
      %p113 = scmp.ne.s32.totalorder %s98, %s112
      %p114 = scmp.eq.s32.totalorder %s18, 0
      %p115 = por %p113, %p114
      %s116 = ssub.s32 %s19, %s38
      %s117 = ssub.s32 %s20, %s34
      %s118 = sor.u32 %s116, %s117
      %p119 = scmp.eq.s32.totalorder %s118, 0
      %s121 = sadd.s32 %s120, 1
      %s122 = scalar_select %p119, %s120, %s121
      %p125 = pneg %p119
      %p126 = scmp.eq.s32.totalorder %s12, 1
      %p127 = por %p125, %p126
      %p128 = scmp.ne.s32.totalorder %s120, %s123
      %p129 = scmp.eq.s32.totalorder %s12, 0
      %p130 = por %p128, %p129
      %p131 = scmp.ne.s32.totalorder %s120, %s123
      %p132 = scmp.eq.s32.totalorder %s17, 1
      %p133 = por %p131, %p132
      %p134 = scmp.ne.s32.totalorder %s123, %s124
      %p135 = scmp.eq.s32.totalorder %s17, 0
      %p136 = por %p134, %p135
      %p137 = scmp.ne.s32.totalorder %s123, %s124
      %p138 = scmp.eq.s32.totalorder %s18, 1
      %p139 = por %p137, %p138
      %p141 = scmp.ne.s32.totalorder %s124, %s140
      %p142 = scmp.eq.s32.totalorder %s18, 0
      %p143 = por %p141, %p142
      %p144 = scmp.le.s32.totalorder 1, %s12
      %p145 = scmp.lt.s32.totalorder %s12, 3
      %p146 = pnand %p144, %p145
      %p147 = pneg %p146
      // Predicated region
      $region9: #{tpu_custom_call.1} parent=5 // pred_check
        _
      $region10: #{tpu_custom_call.1} parent=5 // pred_check_branch
        %149 = sbr.rel (%p146) target = $region12
      $region11: #{tpu_custom_call.1} parent=5 // pred_region
        %s150 = ssub.s32 %s12, 1
        // Predicated region
        $region13: #{tpu_custom_call.1} parent=11 // pred_check
          %p151 = pneg %p87
        $region14: #{tpu_custom_call.1} parent=11 // pred_check_branch
          %153 = sbr.rel (%p151) target = $region16
        $region15: #{tpu_custom_call.1} parent=11 // pred_region
          %p154 = scmp.lt.s32.totalorder %s24, 0
          %s155 = scalar_select %p154, %s24, 0
          %s156 = smul.addr %s155, 8
          %s157 = scalar_lea.vmem %s1, %s156
        $region16: #{tpu_custom_call.1} parent=11 // pred_fallthru
          _
        // Predicated region
        $region17: #{tpu_custom_call.1} parent=11 // pred_check
          %p158 = pneg %p108
        $region18: #{tpu_custom_call.1} parent=11 // pred_check_branch
          %160 = sbr.rel (%p158) target = $region20
        $region19: #{tpu_custom_call.1} parent=11 // pred_region
          _
        $region20: #{tpu_custom_call.1} parent=11 // pred_fallthru
          _
      $region12: #{tpu_custom_call.1} parent=5 // pred_fallthru
        _
      %p161 = scmp.lt.s32.totalorder %s12, 2
      // Predicated region
      $region21: #{tpu_custom_call.1} parent=5 // pred_check
        %p162 = pneg %p161
      $region22: #{tpu_custom_call.1} parent=5 // pred_check_branch
        %164 = sbr.rel (%p162) target = $region24
      $region23: #{tpu_custom_call.1} parent=5 // pred_region
        // Predicated region
        $region25: #{tpu_custom_call.1} parent=23 // pred_check
          %p165 = pneg %p55
        $region26: #{tpu_custom_call.1} parent=23 // pred_check_branch
          %167 = sbr.rel (%p165) target = $region28
        $region27: #{tpu_custom_call.1} parent=23 // pred_region
          %s168 = smul.u32 32, %s20
          %p169 = scmp.lt.s32.totalorder %s19, 1
          %s170 = scalar_select %p169, %s19, 1
          %p171 = scmp.lt.s32.totalorder %s168, 31
          %s172 = scalar_select %p171, %s168, 31
          %p173 = scmp.lt.s32.totalorder %s21, 0
          %s174 = scalar_select %p173, %s21, 0
          %s175 = sadd.s32 %s174, %s172
          %s176 = smul.addr %s170, 32
          %s177 = sadd.s32 %s175, %s176
          %s178 = smul.addr %s177, 8
          %s179 = scalar_lea.vmem %s0, %s178
          %s180 = smul.u32 32, %s20
        $region28: #{tpu_custom_call.1} parent=23 // pred_fallthru
          _
      $region24: #{tpu_custom_call.1} parent=5 // pred_fallthru
        _
      %p181 = scmp.le.s32.totalorder 1, %s12
      %p182 = scmp.lt.s32.totalorder %s12, 3
      %p183 = pnand %p181, %p182
      %p184 = pneg %p183
      // Predicated region
      $region29: #{tpu_custom_call.1} parent=5 // pred_check
        _
      $region30: #{tpu_custom_call.1} parent=5 // pred_check_branch
        %186 = sbr.rel (%p183) target = $region32
      $region31: #{tpu_custom_call.1} parent=5 // pred_region
        %s187 = ssub.s32 %s12, 1
        %s188 = smul.u32 32, %s23
        %p189 = scmp.lt.s32.totalorder %s22, 1
        %s190 = scalar_select %p189, %s22, 1
        %p191 = scmp.lt.s32.totalorder %s188, 31
        %s192 = scalar_select %p191, %s188, 31
        %p193 = scmp.lt.s32.totalorder %s24, 0
        %s194 = scalar_select %p193, %s24, 0
        %s195 = sadd.s32 %s194, %s192
        %s196 = smul.addr %s190, 32
        %s197 = sadd.s32 %s195, %s196
        %s198 = smul.addr %s197, 8
        %s199 = scalar_lea.vmem %s0, %s198
        %p200 = pneg %p61
        %p201 = pneg %p58
        %p202 = scmp.lt.s32.totalorder %s24, 0
        %s203 = scalar_select %p202, %s24, 0
        %s204 = smul.addr %s203, 8
        %s205 = scalar_lea.vmem %s1, %s204
        %p206 = pneg %p87
        %p207 = pneg %p84
        %p208 = pneg %p108
        %p209 = pneg %p105
        %p210 = pneg %p136
        %p211 = pneg %p133
        %s212 = sand.u32 %s123, 1
        %s213 = scalar_lea.sflag [#allocation4], %s212
        %s214 = sand.u32 %s123, 1
        %s215 = smul.addr %s214, 256
        %s216 = scalar_lea.vmem [#allocation3], %s215
        %s217 = smul.u32 32, %s23
        %p218 = scmp.lt.s32.totalorder %s22, 1
        %s219 = scalar_select %p218, %s22, 1
        %p220 = scmp.lt.s32.totalorder %s217, 31
        %s221 = scalar_select %p220, %s217, 31
        %p222 = scmp.lt.s32.totalorder %s24, 0
        %s223 = scalar_select %p222, %s24, 0
        %s224 = sadd.s32 %s223, %s221
        %s225 = smul.addr %s219, 32
        %s226 = sadd.s32 %s224, %s225
        %s227 = smul.addr %s226, 8
        %s228 = scalar_lea.vmem %s0, %s227
        %s229 = smul.u32 32, %s23
        %p230 = scmp.lt.s32.totalorder %s24, 0
        %s231 = scalar_select %p230, %s24, 0
        %s232 = smul.addr %s231, 8
        %s233 = scalar_lea.vmem %s1, %s232
        %s234 = smul.u32 2, %s23
        %p235 = scmp.eq.s32.totalorder %s24, 0
        // Predicated region
        $region33: #{tpu_custom_call.1} parent=31 // pred_check
          %p236 = pneg %p235
        $region34: #{tpu_custom_call.1} parent=31 // pred_check_branch
          %238 = sbr.rel (%p236) target = $region36
        $region35: #{tpu_custom_call.1} parent=31 // pred_region
          %239 = vst [vmem:[#allocation2] sm:$0xff] 0.0
          %240 = vst [vmem:[#allocation2 + $0x8] sm:$0xff] 0.0
          %241 = vst [vmem:[#allocation2 + $0x10] sm:$0xff] 0.0
          %242 = vst [vmem:[#allocation2 + $0x18] sm:$0xff] 0.0
          %243 = vst [vmem:[#allocation2 + $0x20] sm:$0xff] 0.0
          %244 = vst [vmem:[#allocation2 + $0x28] sm:$0xff] 0.0
          %245 = vst [vmem:[#allocation2 + $0x30] sm:$0xff] 0.0
          %246 = vst [vmem:[#allocation2 + $0x38] sm:$0xff] 0.0
          %247 = vst [vmem:[#allocation2 + $0x40] sm:$0xff] 0.0
          %248 = vst [vmem:[#allocation2 + $0x48] sm:$0xff] 0.0
          %249 = vst [vmem:[#allocation2 + $0x50] sm:$0xff] 0.0
          %250 = vst [vmem:[#allocation2 + $0x58] sm:$0xff] 0.0
          %251 = vst [vmem:[#allocation2 + $0x60] sm:$0xff] 0.0
          %252 = vst [vmem:[#allocation2 + $0x68] sm:$0xff] 0.0
          %253 = vst [vmem:[#allocation2 + $0x70] sm:$0xff] 0.0
          %254 = vst [vmem:[#allocation2 + $0x78] sm:$0xff] 0.0
          %255 = vst [vmem:[#allocation2 + $0x80] sm:$0xff] 0.0
          %256 = vst [vmem:[#allocation2 + $0x88] sm:$0xff] 0.0
          %257 = vst [vmem:[#allocation2 + $0x90] sm:$0xff] 0.0
          %258 = vst [vmem:[#allocation2 + $0x98] sm:$0xff] 0.0
          %259 = vst [vmem:[#allocation2 + $0xa0] sm:$0xff] 0.0
          %260 = vst [vmem:[#allocation2 + $0xa8] sm:$0xff] 0.0
          %261 = vst [vmem:[#allocation2 + $0xb0] sm:$0xff] 0.0
          %262 = vst [vmem:[#allocation2 + $0xb8] sm:$0xff] 0.0
          %263 = vst [vmem:[#allocation2 + $0xc0] sm:$0xff] 0.0
          %264 = vst [vmem:[#allocation2 + $0xc8] sm:$0xff] 0.0
          %265 = vst [vmem:[#allocation2 + $0xd0] sm:$0xff] 0.0
          %266 = vst [vmem:[#allocation2 + $0xd8] sm:$0xff] 0.0
          %267 = vst [vmem:[#allocation2 + $0xe0] sm:$0xff] 0.0
          %268 = vst [vmem:[#allocation2 + $0xe8] sm:$0xff] 0.0
          %269 = vst [vmem:[#allocation2 + $0xf0] sm:$0xff] 0.0
          %270 = vst [vmem:[#allocation2 + $0xf8] sm:$0xff] 0.0
        $region36: #{tpu_custom_call.1} parent=31 // pred_fallthru
          _
        %v271 = vld [vmem:[#allocation2] sm:$0xff]
        %v272 = vld [vmem:[#allocation2 + $0x8] sm:$0xff]
        %v273 = vld [vmem:[#allocation2 + $0x10] sm:$0xff]
        %v274 = vld [vmem:[#allocation2 + $0x18] sm:$0xff]
        %v275 = vld [vmem:[#allocation2 + $0x20] sm:$0xff]
        %v276 = vld [vmem:[#allocation2 + $0x28] sm:$0xff]
        %v277 = vld [vmem:[#allocation2 + $0x30] sm:$0xff]
        %v278 = vld [vmem:[#allocation2 + $0x38] sm:$0xff]
        %v279 = vld [vmem:[#allocation2 + $0x40] sm:$0xff]
        %v280 = vld [vmem:[#allocation2 + $0x48] sm:$0xff]
        %v281 = vld [vmem:[#allocation2 + $0x50] sm:$0xff]
        %v282 = vld [vmem:[#allocation2 + $0x58] sm:$0xff]
        %v283 = vld [vmem:[#allocation2 + $0x60] sm:$0xff]
        %v284 = vld [vmem:[#allocation2 + $0x68] sm:$0xff]
        %v285 = vld [vmem:[#allocation2 + $0x70] sm:$0xff]
        %v286 = vld [vmem:[#allocation2 + $0x78] sm:$0xff]
        %v287 = vld [vmem:[#allocation2 + $0x80] sm:$0xff]
        %v288 = vld [vmem:[#allocation2 + $0x88] sm:$0xff]
        %v289 = vld [vmem:[#allocation2 + $0x90] sm:$0xff]
        %v290 = vld [vmem:[#allocation2 + $0x98] sm:$0xff]
        %v291 = vld [vmem:[#allocation2 + $0xa0] sm:$0xff]
        %v292 = vld [vmem:[#allocation2 + $0xa8] sm:$0xff]
        %v293 = vld [vmem:[#allocation2 + $0xb0] sm:$0xff]
        %v294 = vld [vmem:[#allocation2 + $0xb8] sm:$0xff]
        %v295 = vld [vmem:[#allocation2 + $0xc0] sm:$0xff]
        %v296 = vld [vmem:[#allocation2 + $0xc8] sm:$0xff]
        %v297 = vld [vmem:[#allocation2 + $0xd0] sm:$0xff]
        %v298 = vld [vmem:[#allocation2 + $0xd8] sm:$0xff]
        %v299 = vld [vmem:[#allocation2 + $0xe0] sm:$0xff]
        %v300 = vld [vmem:[#allocation2 + $0xe8] sm:$0xff]
        %v301 = vld [vmem:[#allocation2 + $0xf0] sm:$0xff]
        %v302 = vld [vmem:[#allocation2 + $0xf8] sm:$0xff]
        %v303 = vld [vmem:[%s233] sm:$0xff]
        %v304 = vld [vmem:[%s233 + $0x8] sm:$0xff]
        %v305 = vld [vmem:[%s233 + $0x10] sm:$0xff]
        %v306 = vld [vmem:[%s233 + $0x18] sm:$0xff]
        %v307 = vld [vmem:[%s233 + $0x20] sm:$0xff]
        %v308 = vld [vmem:[%s233 + $0x28] sm:$0xff]
        %v309 = vld [vmem:[%s233 + $0x30] sm:$0xff]
        %v310 = vld [vmem:[%s233 + $0x38] sm:$0xff]
        %v311 = vld [vmem:[%s233 + $0x40] sm:$0xff]
        %v312 = vld [vmem:[%s233 + $0x48] sm:$0xff]
        %v313 = vld [vmem:[%s233 + $0x50] sm:$0xff]
        %v314 = vld [vmem:[%s233 + $0x58] sm:$0xff]
        %v315 = vld [vmem:[%s233 + $0x60] sm:$0xff]
        %v316 = vld [vmem:[%s233 + $0x68] sm:$0xff]
        %v317 = vld [vmem:[%s233 + $0x70] sm:$0xff]
        %v318 = vld [vmem:[%s233 + $0x78] sm:$0xff]
        %v319 = vld [vmem:[%s228] sm:$0xff]
        %v320 = vld [vmem:[%s228 + $0x8] sm:$0xff]
        %v321 = vld [vmem:[%s228 + $0x10] sm:$0xff]
        %v322 = vld [vmem:[%s228 + $0x18] sm:$0xff]
        %v323 = vld [vmem:[%s228 + $0x20] sm:$0xff]
        %v324 = vld [vmem:[%s228 + $0x28] sm:$0xff]
        %v325 = vld [vmem:[%s228 + $0x30] sm:$0xff]
        %v326 = vld [vmem:[%s228 + $0x38] sm:$0xff]
        %v327 = vld [vmem:[%s228 + $0x40] sm:$0xff]
        %v328 = vld [vmem:[%s228 + $0x48] sm:$0xff]
        %v329 = vld [vmem:[%s228 + $0x50] sm:$0xff]
        %v330 = vld [vmem:[%s228 + $0x58] sm:$0xff]
        %v331 = vld [vmem:[%s228 + $0x60] sm:$0xff]
        %v332 = vld [vmem:[%s228 + $0x68] sm:$0xff]
        %v333 = vld [vmem:[%s228 + $0x70] sm:$0xff]
        %v334 = vld [vmem:[%s228 + $0x78] sm:$0xff]
        %v335 = vld [vmem:[%s228 + $0x80] sm:$0xff]
        %v336 = vld [vmem:[%s228 + $0x88] sm:$0xff]
        %v337 = vld [vmem:[%s228 + $0x90] sm:$0xff]
        %v338 = vld [vmem:[%s228 + $0x98] sm:$0xff]
        %v339 = vld [vmem:[%s228 + $0xa0] sm:$0xff]
        %v340 = vld [vmem:[%s228 + $0xa8] sm:$0xff]
        %v341 = vld [vmem:[%s228 + $0xb0] sm:$0xff]
        %v342 = vld [vmem:[%s228 + $0xb8] sm:$0xff]
        %v343 = vld [vmem:[%s228 + $0xc0] sm:$0xff]
        %v344 = vld [vmem:[%s228 + $0xc8] sm:$0xff]
        %v345 = vld [vmem:[%s228 + $0xd0] sm:$0xff]
        %v346 = vld [vmem:[%s228 + $0xd8] sm:$0xff]
        %v347 = vld [vmem:[%s228 + $0xe0] sm:$0xff]
        %v348 = vld [vmem:[%s228 + $0xe8] sm:$0xff]
        %v349 = vld [vmem:[%s228 + $0xf0] sm:$0xff]
        %v350 = vld [vmem:[%s228 + $0xf8] sm:$0xff]
        %vm351 = vcmask 523264
        %v353 = vsel %vm351, %v303, 0
        %v356 = vsel %vm351, %v304, 0
        %v359 = vsel %vm351, %v305, 0
        %v362 = vsel %vm351, %v306, 0
        %v365 = vsel %vm351, %v307, 0
        %v368 = vsel %vm351, %v308, 0
        %v371 = vsel %vm351, %v309, 0
        %v374 = vsel %vm351, %v310, 0
        %v377 = vsel %vm351, %v311, 0
        %v380 = vsel %vm351, %v312, 0
        %v383 = vsel %vm351, %v313, 0
        %v386 = vsel %vm351, %v314, 0
        %v389 = vsel %vm351, %v315, 0
        %v392 = vsel %vm351, %v316, 0
        %v395 = vsel %vm351, %v317, 0
        %v398 = vsel %vm351, %v318, 0
        %v401 = vsel %vm351, %v319, 0
        %v404 = vsel %vm351, %v320, 0
        %v407 = vsel %vm351, %v321, 0
        %v410 = vsel %vm351, %v322, 0
        %v413 = vsel %vm351, %v323, 0
        %v416 = vsel %vm351, %v324, 0
        %v419 = vsel %vm351, %v325, 0
        %v422 = vsel %vm351, %v326, 0
        %v425 = vsel %vm351, %v327, 0
        %v428 = vsel %vm351, %v328, 0
        %v431 = vsel %vm351, %v329, 0
        %v434 = vsel %vm351, %v330, 0
        %v437 = vsel %vm351, %v331, 0
        %v440 = vsel %vm351, %v332, 0
        %v443 = vsel %vm351, %v333, 0
        %v446 = vsel %vm351, %v334, 0
        %v449 = vsel %vm351, %v335, 0
        %v452 = vsel %vm351, %v336, 0
        %v455 = vsel %vm351, %v337, 0
        %v458 = vsel %vm351, %v338, 0
        %v461 = vsel %vm351, %v339, 0
        %v464 = vsel %vm351, %v340, 0
        %v467 = vsel %vm351, %v341, 0
        %v470 = vsel %vm351, %v342, 0
        %v473 = vsel %vm351, %v343, 0
        %v476 = vsel %vm351, %v344, 0
        %v479 = vsel %vm351, %v345, 0
        %v482 = vsel %vm351, %v346, 0
        %v485 = vsel %vm351, %v347, 0
        %v488 = vsel %vm351, %v348, 0
        %v491 = vsel %vm351, %v349, 0
        %v494 = vsel %vm351, %v350, 0
        %496 = vmatprep.subr.mxu0 0.0
        %497 = vmatpush1.xpose.msra.mxu0 %v446
        %498 = vmatprep.subr.mxu0 0.0
        %499 = vmatpush1.xpose.msra.mxu0 %v443
        %500 = vmatprep.subr.mxu0 0.0
        %501 = vmatpush1.xpose.msra.mxu0 %v440
        %502 = vmatprep.subr.mxu0 0.0
        %503 = vmatpush1.xpose.msra.mxu0 %v437
        %504 = vmatprep.subr.mxu0 0.0
        %505 = vmatpush1.xpose.msra.mxu0 %v434
        %506 = vmatprep.subr.mxu0 0.0
        %507 = vmatpush1.xpose.msra.mxu0 %v431
        %508 = vmatprep.subr.mxu0 0.0
        %509 = vmatpush1.xpose.msra.mxu0 %v428
        %510 = vmatprep.subr.mxu0 0.0
        %511 = vmatpush1.xpose.msra.mxu0 %v425
        %512 = vmatprep.subr.mxu0 0.0
        %513 = vmatpush1.xpose.msra.mxu0 %v422
        %514 = vmatprep.subr.mxu0 0.0
        %515 = vmatpush1.xpose.msra.mxu0 %v419
        %516 = vmatprep.subr.mxu0 0.0
        %517 = vmatpush1.xpose.msra.mxu0 %v416
        %518 = vmatprep.subr.mxu0 0.0
        %519 = vmatpush1.xpose.msra.mxu0 %v413
        %520 = vmatprep.subr.mxu0 0.0
        %521 = vmatpush1.xpose.msra.mxu0 %v410
        %522 = vmatprep.subr.mxu0 0.0
        %523 = vmatpush1.xpose.msra.mxu0 %v407
        %524 = vmatprep.subr.mxu0 0.0
        %525 = vmatpush1.xpose.msra.mxu0 %v404
        %526 = vmatprep.subr.mxu0 0.0
        %527 = vmatpush1.xpose.msra.mxu0 %v401
        %528 = vmatprep.subr.mxu0 0.0
        %529 = vmatpush2.xpose.msra.mxu0 %v494
        %530 = vmatprep.subr.mxu0 0.0
        %531 = vmatpush2.xpose.msra.mxu0 %v491
        %532 = vmatprep.subr.mxu0 0.0
        %533 = vmatpush2.xpose.msra.mxu0 %v488
        %534 = vmatprep.subr.mxu0 0.0
        %535 = vmatpush2.xpose.msra.mxu0 %v485
        %536 = vmatprep.subr.mxu0 0.0
        %537 = vmatpush2.xpose.msra.mxu0 %v482
        %538 = vmatprep.subr.mxu0 0.0
        %539 = vmatpush2.xpose.msra.mxu0 %v479
        %540 = vmatprep.subr.mxu0 0.0
        %541 = vmatpush2.xpose.msra.mxu0 %v476
        %542 = vmatprep.subr.mxu0 0.0
        %543 = vmatpush2.xpose.msra.mxu0 %v473
        %544 = vmatprep.subr.mxu0 0.0
        %545 = vmatpush2.xpose.msra.mxu0 %v470
        %546 = vmatprep.subr.mxu0 0.0
        %547 = vmatpush2.xpose.msra.mxu0 %v467
        %548 = vmatprep.subr.mxu0 0.0
        %549 = vmatpush2.xpose.msra.mxu0 %v464
        %550 = vmatprep.subr.mxu0 0.0
        %551 = vmatpush2.xpose.msra.mxu0 %v461
        %552 = vmatprep.subr.mxu0 0.0
        %553 = vmatpush2.xpose.msra.mxu0 %v458
        %554 = vmatprep.subr.mxu0 0.0
        %555 = vmatpush2.xpose.msra.mxu0 %v455
        %556 = vmatprep.subr.mxu0 0.0
        %557 = vmatpush2.xpose.msra.mxu0 %v452
        %558 = vmatprep.subr.mxu0 0.0
        %559 = vmatpush2.xpose.msra.mxu0 %v449
        %560 = vmatprep.mubr.f32.mxu0 0.0
        %561 = vmatmul.mubr.f32.gmra.mxu0 %v353
        %v562 = vpop.f32.mrf.mxu0
        %v563 = vadd.f32 0.0, %v562
        %v564 = vpop.f32.mrf.mxu0
        %v565 = vadd.f32 0.0, %v564
        %566 = vmatprep.mubr.f32.mxu0 0.0
        %567 = vmatmul.mubr.f32.gmra.mxu0 %v356
        %v568 = vpop.f32.mrf.mxu0
        %v569 = vadd.f32 0.0, %v568
        %v570 = vpop.f32.mrf.mxu0
        %v571 = vadd.f32 0.0, %v570
        %572 = vmatprep.mubr.f32.mxu0 0.0
        %573 = vmatmul.mubr.f32.gmra.mxu0 %v359
        %v574 = vpop.f32.mrf.mxu0
        %v575 = vadd.f32 0.0, %v574
        %v576 = vpop.f32.mrf.mxu0
        %v577 = vadd.f32 0.0, %v576
        %578 = vmatprep.mubr.f32.mxu0 0.0
        %579 = vmatmul.mubr.f32.gmra.mxu0 %v362
        %v580 = vpop.f32.mrf.mxu0
        %v581 = vadd.f32 0.0, %v580
        %v582 = vpop.f32.mrf.mxu0
        %v583 = vadd.f32 0.0, %v582
        %584 = vmatprep.mubr.f32.mxu0 0.0
        %585 = vmatmul.mubr.f32.gmra.mxu0 %v365
        %v586 = vpop.f32.mrf.mxu0
        %v587 = vadd.f32 0.0, %v586
        %v588 = vpop.f32.mrf.mxu0
        %v589 = vadd.f32 0.0, %v588
        %590 = vmatprep.mubr.f32.mxu0 0.0
        %591 = vmatmul.mubr.f32.gmra.mxu0 %v368
        %v592 = vpop.f32.mrf.mxu0
        %v593 = vadd.f32 0.0, %v592
        %v594 = vpop.f32.mrf.mxu0
        %v595 = vadd.f32 0.0, %v594
        %596 = vmatprep.mubr.f32.mxu0 0.0
        %597 = vmatmul.mubr.f32.gmra.mxu0 %v371
        %v598 = vpop.f32.mrf.mxu0
        %v599 = vadd.f32 0.0, %v598
        %v600 = vpop.f32.mrf.mxu0
        %v601 = vadd.f32 0.0, %v600
        %602 = vmatprep.mubr.f32.mxu0 0.0
        %603 = vmatmul.mubr.f32.gmra.mxu0 %v374
        %v604 = vpop.f32.mrf.mxu0
        %v605 = vadd.f32 0.0, %v604
        %v606 = vpop.f32.mrf.mxu0
        %v607 = vadd.f32 0.0, %v606
        %608 = vmatprep.mubr.f32.mxu0 0.0
        %609 = vmatmul.mubr.f32.gmra.mxu0 %v377
        %v610 = vpop.f32.mrf.mxu0
        %v611 = vadd.f32 0.0, %v610
        %v612 = vpop.f32.mrf.mxu0
        %v613 = vadd.f32 0.0, %v612
        %614 = vmatprep.mubr.f32.mxu0 0.0
        %615 = vmatmul.mubr.f32.gmra.mxu0 %v380
        %v616 = vpop.f32.mrf.mxu0
        %v617 = vadd.f32 0.0, %v616
        %v618 = vpop.f32.mrf.mxu0
        %v619 = vadd.f32 0.0, %v618
        %620 = vmatprep.mubr.f32.mxu0 0.0
        %621 = vmatmul.mubr.f32.gmra.mxu0 %v383
        %v622 = vpop.f32.mrf.mxu0
        %v623 = vadd.f32 0.0, %v622
        %v624 = vpop.f32.mrf.mxu0
        %v625 = vadd.f32 0.0, %v624
        %626 = vmatprep.mubr.f32.mxu0 0.0
        %627 = vmatmul.mubr.f32.gmra.mxu0 %v386
        %v628 = vpop.f32.mrf.mxu0
        %v629 = vadd.f32 0.0, %v628
        %v630 = vpop.f32.mrf.mxu0
        %v631 = vadd.f32 0.0, %v630
        %632 = vmatprep.mubr.f32.mxu0 0.0
        %633 = vmatmul.mubr.f32.gmra.mxu0 %v389
        %v634 = vpop.f32.mrf.mxu0
        %v635 = vadd.f32 0.0, %v634
        %v636 = vpop.f32.mrf.mxu0
        %v637 = vadd.f32 0.0, %v636
        %638 = vmatprep.mubr.f32.mxu0 0.0
        %639 = vmatmul.mubr.f32.gmra.mxu0 %v392
        %v640 = vpop.f32.mrf.mxu0
        %v641 = vadd.f32 0.0, %v640
        %v642 = vpop.f32.mrf.mxu0
        %v643 = vadd.f32 0.0, %v642
        %644 = vmatprep.mubr.f32.mxu0 0.0
        %645 = vmatmul.mubr.f32.gmra.mxu0 %v395
        %v646 = vpop.f32.mrf.mxu0
        %v647 = vadd.f32 0.0, %v646
        %v648 = vpop.f32.mrf.mxu0
        %v649 = vadd.f32 0.0, %v648
        %650 = vmatprep.mubr.f32.mxu0 0.0
        %651 = vmatmul.mubr.f32.gmra.mxu0 %v398
        %v652 = vpop.f32.mrf.mxu0
        %v653 = vadd.f32 0.0, %v652
        %v654 = vpop.f32.mrf.mxu0
        %v655 = vadd.f32 0.0, %v654
        %656 = vdwg.mxu0
        %v657 = vadd.f32 %v271, %v563
        %v658 = vadd.f32 %v272, %v565
        %v659 = vadd.f32 %v273, %v569
        %v660 = vadd.f32 %v274, %v571
        %v661 = vadd.f32 %v275, %v575
        %v662 = vadd.f32 %v276, %v577
        %v663 = vadd.f32 %v277, %v581
        %v664 = vadd.f32 %v278, %v583
        %v665 = vadd.f32 %v279, %v587
        %v666 = vadd.f32 %v280, %v589
        %v667 = vadd.f32 %v281, %v593
        %v668 = vadd.f32 %v282, %v595
        %v669 = vadd.f32 %v283, %v599
        %v670 = vadd.f32 %v284, %v601
        %v671 = vadd.f32 %v285, %v605
        %v672 = vadd.f32 %v286, %v607
        %v673 = vadd.f32 %v287, %v611
        %v674 = vadd.f32 %v288, %v613
        %v675 = vadd.f32 %v289, %v617
        %v676 = vadd.f32 %v290, %v619
        %v677 = vadd.f32 %v291, %v623
        %v678 = vadd.f32 %v292, %v625
        %v679 = vadd.f32 %v293, %v629
        %v680 = vadd.f32 %v294, %v631
        %v681 = vadd.f32 %v295, %v635
        %v682 = vadd.f32 %v296, %v637
        %v683 = vadd.f32 %v297, %v641
        %v684 = vadd.f32 %v298, %v643
        %v685 = vadd.f32 %v299, %v647
        %v686 = vadd.f32 %v300, %v649
        %v687 = vadd.f32 %v301, %v653
        %v688 = vadd.f32 %v302, %v655
        %689 = vst [vmem:[#allocation2] sm:$0xff] %v657
        %690 = vst [vmem:[#allocation2 + $0x8] sm:$0xff] %v658
        %691 = vst [vmem:[#allocation2 + $0x10] sm:$0xff] %v659
        %692 = vst [vmem:[#allocation2 + $0x18] sm:$0xff] %v660
        %693 = vst [vmem:[#allocation2 + $0x20] sm:$0xff] %v661
        %694 = vst [vmem:[#allocation2 + $0x28] sm:$0xff] %v662
        %695 = vst [vmem:[#allocation2 + $0x30] sm:$0xff] %v663
        %696 = vst [vmem:[#allocation2 + $0x38] sm:$0xff] %v664
        %697 = vst [vmem:[#allocation2 + $0x40] sm:$0xff] %v665
        %698 = vst [vmem:[#allocation2 + $0x48] sm:$0xff] %v666
        %699 = vst [vmem:[#allocation2 + $0x50] sm:$0xff] %v667
        %700 = vst [vmem:[#allocation2 + $0x58] sm:$0xff] %v668
        %701 = vst [vmem:[#allocation2 + $0x60] sm:$0xff] %v669
        %702 = vst [vmem:[#allocation2 + $0x68] sm:$0xff] %v670
        %703 = vst [vmem:[#allocation2 + $0x70] sm:$0xff] %v671
        %704 = vst [vmem:[#allocation2 + $0x78] sm:$0xff] %v672
        %705 = vst [vmem:[#allocation2 + $0x80] sm:$0xff] %v673
        %706 = vst [vmem:[#allocation2 + $0x88] sm:$0xff] %v674
        %707 = vst [vmem:[#allocation2 + $0x90] sm:$0xff] %v675
        %708 = vst [vmem:[#allocation2 + $0x98] sm:$0xff] %v676
        %709 = vst [vmem:[#allocation2 + $0xa0] sm:$0xff] %v677
        %710 = vst [vmem:[#allocation2 + $0xa8] sm:$0xff] %v678
        %711 = vst [vmem:[#allocation2 + $0xb0] sm:$0xff] %v679
        %712 = vst [vmem:[#allocation2 + $0xb8] sm:$0xff] %v680
        %713 = vst [vmem:[#allocation2 + $0xc0] sm:$0xff] %v681
        %714 = vst [vmem:[#allocation2 + $0xc8] sm:$0xff] %v682
        %715 = vst [vmem:[#allocation2 + $0xd0] sm:$0xff] %v683
        %716 = vst [vmem:[#allocation2 + $0xd8] sm:$0xff] %v684
        %717 = vst [vmem:[#allocation2 + $0xe0] sm:$0xff] %v685
        %718 = vst [vmem:[#allocation2 + $0xe8] sm:$0xff] %v686
        %719 = vst [vmem:[#allocation2 + $0xf0] sm:$0xff] %v687
        %720 = vst [vmem:[#allocation2 + $0xf8] sm:$0xff] %v688
        // Predicated region
        $region37: #{tpu_custom_call.1} parent=31 // pred_check
          %p721 = pneg %p235
        $region38: #{tpu_custom_call.1} parent=31 // pred_check_branch
          %723 = sbr.rel (%p721) target = $region40
        $region39: #{tpu_custom_call.1} parent=31 // pred_region
          %v724 = vld [vmem:[#allocation2] sm:$0xff]
          %v725 = vld [vmem:[#allocation2 + $0x8] sm:$0xff]
          %v726 = vld [vmem:[#allocation2 + $0x10] sm:$0xff]
          %v727 = vld [vmem:[#allocation2 + $0x18] sm:$0xff]
          %v728 = vld [vmem:[#allocation2 + $0x20] sm:$0xff]
          %v729 = vld [vmem:[#allocation2 + $0x28] sm:$0xff]
          %v730 = vld [vmem:[#allocation2 + $0x30] sm:$0xff]
          %v731 = vld [vmem:[#allocation2 + $0x38] sm:$0xff]
          %v732 = vld [vmem:[#allocation2 + $0x40] sm:$0xff]
          %v733 = vld [vmem:[#allocation2 + $0x48] sm:$0xff]
          %v734 = vld [vmem:[#allocation2 + $0x50] sm:$0xff]
          %v735 = vld [vmem:[#allocation2 + $0x58] sm:$0xff]
          %v736 = vld [vmem:[#allocation2 + $0x60] sm:$0xff]
          %v737 = vld [vmem:[#allocation2 + $0x68] sm:$0xff]
          %v738 = vld [vmem:[#allocation2 + $0x70] sm:$0xff]
          %v739 = vld [vmem:[#allocation2 + $0x78] sm:$0xff]
          %v740 = vld [vmem:[#allocation2 + $0x80] sm:$0xff]
          %v741 = vld [vmem:[#allocation2 + $0x88] sm:$0xff]
          %v742 = vld [vmem:[#allocation2 + $0x90] sm:$0xff]
          %v743 = vld [vmem:[#allocation2 + $0x98] sm:$0xff]
          %v744 = vld [vmem:[#allocation2 + $0xa0] sm:$0xff]
          %v745 = vld [vmem:[#allocation2 + $0xa8] sm:$0xff]
          %v746 = vld [vmem:[#allocation2 + $0xb0] sm:$0xff]
          %v747 = vld [vmem:[#allocation2 + $0xb8] sm:$0xff]
          %v748 = vld [vmem:[#allocation2 + $0xc0] sm:$0xff]
          %v749 = vld [vmem:[#allocation2 + $0xc8] sm:$0xff]
          %v750 = vld [vmem:[#allocation2 + $0xd0] sm:$0xff]
          %v751 = vld [vmem:[#allocation2 + $0xd8] sm:$0xff]
          %v752 = vld [vmem:[#allocation2 + $0xe0] sm:$0xff]
          %v753 = vld [vmem:[#allocation2 + $0xe8] sm:$0xff]
          %v754 = vld [vmem:[#allocation2 + $0xf0] sm:$0xff]
          %v755 = vld [vmem:[#allocation2 + $0xf8] sm:$0xff]
          %v756 = vld [vmem:[%s2] sm:$0xff]
          %v757 = vld [vmem:[%s2 + $0x8] sm:$0xff]
          %v758 = vld [vmem:[%s2 + $0x10] sm:$0xff]
          %v759 = vld [vmem:[%s2 + $0x18] sm:$0xff]
          %v760 = vld [vmem:[%s2 + $0x20] sm:$0xff]
          %v761 = vld [vmem:[%s2 + $0x28] sm:$0xff]
          %v762 = vld [vmem:[%s2 + $0x30] sm:$0xff]
          %v763 = vld [vmem:[%s2 + $0x38] sm:$0xff]
          %v764 = vld [vmem:[%s2 + $0x40] sm:$0xff]
          %v765 = vld [vmem:[%s2 + $0x48] sm:$0xff]
          %v766 = vld [vmem:[%s2 + $0x50] sm:$0xff]
          %v767 = vld [vmem:[%s2 + $0x58] sm:$0xff]
          %v768 = vld [vmem:[%s2 + $0x60] sm:$0xff]
          %v769 = vld [vmem:[%s2 + $0x68] sm:$0xff]
          %v770 = vld [vmem:[%s2 + $0x70] sm:$0xff]
          %v771 = vld [vmem:[%s2 + $0x78] sm:$0xff]
          %773 = vset.pattern.permute.xlu0 0
          %774 = vperm.xlu0 %773, %v756
          %v775 = vpop.permute.xlu0 %774
          %778 = vset.pattern.permute.xlu0 0
          %779 = vperm.xlu0 %778, %v757
          %v780 = vpop.permute.xlu0 %779
          %783 = vset.pattern.permute.xlu0 0
          %784 = vperm.xlu0 %783, %v758
          %v785 = vpop.permute.xlu0 %784
          %788 = vset.pattern.permute.xlu0 0
          %789 = vperm.xlu0 %788, %v759
          %v790 = vpop.permute.xlu0 %789
          %793 = vset.pattern.permute.xlu0 0
          %794 = vperm.xlu0 %793, %v760
          %v795 = vpop.permute.xlu0 %794
          %798 = vset.pattern.permute.xlu0 0
          %799 = vperm.xlu0 %798, %v761
          %v800 = vpop.permute.xlu0 %799
          %803 = vset.pattern.permute.xlu0 0
          %804 = vperm.xlu0 %803, %v762
          %v805 = vpop.permute.xlu0 %804
          %808 = vset.pattern.permute.xlu0 0
          %809 = vperm.xlu0 %808, %v763
          %v810 = vpop.permute.xlu0 %809
          %813 = vset.pattern.permute.xlu0 0
          %814 = vperm.xlu0 %813, %v764
          %v815 = vpop.permute.xlu0 %814
          %818 = vset.pattern.permute.xlu0 0
          %819 = vperm.xlu0 %818, %v765
          %v820 = vpop.permute.xlu0 %819
          %823 = vset.pattern.permute.xlu0 0
          %824 = vperm.xlu0 %823, %v766
          %v825 = vpop.permute.xlu0 %824
          %828 = vset.pattern.permute.xlu0 0
          %829 = vperm.xlu0 %828, %v767
          %v830 = vpop.permute.xlu0 %829
          %833 = vset.pattern.permute.xlu0 0
          %834 = vperm.xlu0 %833, %v768
          %v835 = vpop.permute.xlu0 %834
          %838 = vset.pattern.permute.xlu0 0
          %839 = vperm.xlu0 %838, %v769
          %v840 = vpop.permute.xlu0 %839
          %843 = vset.pattern.permute.xlu0 0
          %844 = vperm.xlu0 %843, %v770
          %v845 = vpop.permute.xlu0 %844
          %848 = vset.pattern.permute.xlu0 0
          %849 = vperm.xlu0 %848, %v771
          %v850 = vpop.permute.xlu0 %849
          %v852 = vadd.f32 %v724, %v775
          %v853 = vadd.f32 %v725, %v775
          %v854 = vadd.f32 %v726, %v780
          %v855 = vadd.f32 %v727, %v780
          %v856 = vadd.f32 %v728, %v785
          %v857 = vadd.f32 %v729, %v785
          %v858 = vadd.f32 %v730, %v790
          %v859 = vadd.f32 %v731, %v790
          %v860 = vadd.f32 %v732, %v795
          %v861 = vadd.f32 %v733, %v795
          %v862 = vadd.f32 %v734, %v800
          %v863 = vadd.f32 %v735, %v800
          %v864 = vadd.f32 %v736, %v805
          %v865 = vadd.f32 %v737, %v805
          %v866 = vadd.f32 %v738, %v810
          %v867 = vadd.f32 %v739, %v810
          %v868 = vadd.f32 %v740, %v815
          %v869 = vadd.f32 %v741, %v815
          %v870 = vadd.f32 %v742, %v820
          %v871 = vadd.f32 %v743, %v820
          %v872 = vadd.f32 %v744, %v825
          %v873 = vadd.f32 %v745, %v825
          %v874 = vadd.f32 %v746, %v830
          %v875 = vadd.f32 %v747, %v830
          %v876 = vadd.f32 %v748, %v835
          %v877 = vadd.f32 %v749, %v835
          %v878 = vadd.f32 %v750, %v840
          %v879 = vadd.f32 %v751, %v840
          %v880 = vadd.f32 %v752, %v845
          %v881 = vadd.f32 %v753, %v845
          %v882 = vadd.f32 %v754, %v850
          %v883 = vadd.f32 %v755, %v850
          %884 = vst [vmem:[%s216] sm:$0xff] %v852
          %885 = vst [vmem:[%s216 + $0x8] sm:$0xff] %v853
          %886 = vst [vmem:[%s216 + $0x10] sm:$0xff] %v854
          %887 = vst [vmem:[%s216 + $0x18] sm:$0xff] %v855
          %888 = vst [vmem:[%s216 + $0x20] sm:$0xff] %v856
          %889 = vst [vmem:[%s216 + $0x28] sm:$0xff] %v857
          %890 = vst [vmem:[%s216 + $0x30] sm:$0xff] %v858
          %891 = vst [vmem:[%s216 + $0x38] sm:$0xff] %v859
          %892 = vst [vmem:[%s216 + $0x40] sm:$0xff] %v860
          %893 = vst [vmem:[%s216 + $0x48] sm:$0xff] %v861
          %894 = vst [vmem:[%s216 + $0x50] sm:$0xff] %v862
          %895 = vst [vmem:[%s216 + $0x58] sm:$0xff] %v863
          %896 = vst [vmem:[%s216 + $0x60] sm:$0xff] %v864
          %897 = vst [vmem:[%s216 + $0x68] sm:$0xff] %v865
          %898 = vst [vmem:[%s216 + $0x70] sm:$0xff] %v866
          %899 = vst [vmem:[%s216 + $0x78] sm:$0xff] %v867
          %900 = vst [vmem:[%s216 + $0x80] sm:$0xff] %v868
          %901 = vst [vmem:[%s216 + $0x88] sm:$0xff] %v869
          %902 = vst [vmem:[%s216 + $0x90] sm:$0xff] %v870
          %903 = vst [vmem:[%s216 + $0x98] sm:$0xff] %v871
          %904 = vst [vmem:[%s216 + $0xa0] sm:$0xff] %v872
          %905 = vst [vmem:[%s216 + $0xa8] sm:$0xff] %v873
          %906 = vst [vmem:[%s216 + $0xb0] sm:$0xff] %v874
          %907 = vst [vmem:[%s216 + $0xb8] sm:$0xff] %v875
          %908 = vst [vmem:[%s216 + $0xc0] sm:$0xff] %v876
          %909 = vst [vmem:[%s216 + $0xc8] sm:$0xff] %v877
          %910 = vst [vmem:[%s216 + $0xd0] sm:$0xff] %v878
          %911 = vst [vmem:[%s216 + $0xd8] sm:$0xff] %v879
          %912 = vst [vmem:[%s216 + $0xe0] sm:$0xff] %v880
          %913 = vst [vmem:[%s216 + $0xe8] sm:$0xff] %v881
          %914 = vst [vmem:[%s216 + $0xf0] sm:$0xff] %v882
          %915 = vst [vmem:[%s216 + $0xf8] sm:$0xff] %v883
        $region40: #{tpu_custom_call.1} parent=31 // pred_fallthru
          _
        %s916 = sand.u32 %s123, 1
        %s917 = scalar_lea.sflag [#allocation4], %s916
        %s918 = sand.u32 %s123, 1
        %s919 = smul.addr %s918, 256
        %s920 = scalar_lea.vmem [#allocation3], %s919
        // Predicated region
        $region41: #{tpu_custom_call.1} parent=31 // pred_check
          %p921 = pneg %p133
        $region42: #{tpu_custom_call.1} parent=31 // pred_check_branch
          %923 = sbr.rel (%p921) target = $region44
        $region43: #{tpu_custom_call.1} parent=31 // pred_region
          %s924 = smul.u32 2, %s23
          %s926 = ssub.s32 4096, 4096
          %927 = vsyncadd %s917, %s926
          %s928 = smul.addr %s22, 32
          %s929 = sadd.s32 %s924, %s928
          %s930 = smul.addr %s929, 128
          %s931 = scalar_lea.hbm %s3, %s930
          %s932 = sshll.u32 %s920, 4
          %s933 = int_to_ptr.vmem [resolvable:$true] %s932
          %938 = dma.vmem_to_hbm [thread:$0]  %s933, 4096, %s931, %s917, 256, 256, 16
        $region44: #{tpu_custom_call.1} parent=31 // pred_fallthru
          _
      $region32: #{tpu_custom_call.1} parent=5 // pred_fallthru
        _
      %p939 = scmp.le.s32.totalorder 2, %s12
      // Predicated region
      $region45: #{tpu_custom_call.1} parent=5 // pred_check
        %p940 = pneg %p939
      $region46: #{tpu_custom_call.1} parent=5 // pred_check_branch
        %942 = sbr.rel (%p940) target = $region48
      $region47: #{tpu_custom_call.1} parent=5 // pred_region
        %s943 = ssub.s32 %s12, 2
        // Predicated region
        $region49: #{tpu_custom_call.1} parent=47 // pred_check
          %p944 = pneg %p139
        $region50: #{tpu_custom_call.1} parent=47 // pred_check_branch
          %946 = sbr.rel (%p944) target = $region52
        $region51: #{tpu_custom_call.1} parent=47 // pred_region
          %s947 = sand.u32 %s124, 1
          %s948 = scalar_lea.sflag [#allocation4], %s947
          %s949 = sand.u32 %s124, 1
          %s950 = smul.addr %s949, 256
          %s951 = scalar_lea.vmem [#allocation3], %s950
          %952 = dma.done %s948, 4096
        $region52: #{tpu_custom_call.1} parent=47 // pred_fallthru
          _
      $region48: #{tpu_custom_call.1} parent=5 // pred_fallthru
        _
    $region6: #{tpu_custom_call.1} parent=1 // loop_footer
      %s16 = sadd.s32 1, %s12
    $region7: #{tpu_custom_call.1} parent=1 // loop_footer_branch
      %11 = sbr.rel target = $region3
    $region8: #{tpu_custom_call.1} parent=1 // loop_exit
      _
    %953 = vsyncpa [#allocation4], 1
    %s954 = scalar_lea.sflag [#allocation4], 1
    %955 = vsyncpa %s954, 1

</llo_original>
